<compile_context>
chip_gen: v7x
topology: tpu7x:2x2x1
jax: 0.10.0
libtpu: 0.0.40
codegen_flags: <defaults>
</compile_context>

<pallas_src>
import jax
import jax.numpy as jnp
from jax.experimental import pallas as pl
from jax.experimental.pallas import tpu as pltpu


def _softshrink_kernel(lambd_ref, x_ref, o_ref):
    # y = x - clip(x, -lambd, lambd)  ==  relu(|x| - lambd) * sign(x)
    lam = lambd_ref[0]                       # f32 scalar from SMEM (prefetched)
    x = x_ref[...]
    y = x - jnp.clip(x, -lam, lam)           # promotes narrow dtypes to f32
    o_ref[...] = y.astype(o_ref.dtype)


def modified_softshrink(x, lambd=0.5, *, target_block_bytes=None,
                        donate_input=False):
    """Elementwise modified softshrink. x: any shape, float dtype."""
    orig_shape = x.shape
    dtype = x.dtype
    n = x.size
    itemsize = jnp.dtype(dtype).itemsize

    # Widest lane dim (multiple of 128) that divides n -> zero-copy reshape,
    # no pad, no trailing slice.
    lane = None
    for cand in (1024, 512, 256, 128):
        if n % cand == 0:
            lane = cand
            break
    if lane is None:
        # Ragged element count: a fused XLA elementwise op is exactly one HBM
        # read + one write -- cheaper than any pad/slice/concat around a
        # kernel call, so don't pay an extra pass here.
        return (x - jnp.clip(x, -lambd, lambd)).astype(dtype)

    rows = n // lane
    x2d = jnp.ravel(x).reshape(rows, lane)   # reshape of contiguous data: free

    # ---- per-generation block sizing -------------------------------------
    # Input + output are each double-buffered -> 4 live block buffers.
    try:
        phys_vmem = pltpu.get_tpu_info().vmem_capacity_bytes
    except Exception:  # be robust to API/field changes
        phys_vmem = 64 * 1024 * 1024         # v7x (smallest) -- safe everywhere
    if target_block_bytes is None:
        target_block_bytes = min(8 * 1024 * 1024, (phys_vmem // 2) // 4)
    vmem_limit = int(min(phys_vmem * 3 // 4,
                         max(32 * 1024 * 1024,
                             4 * target_block_bytes + 8 * 1024 * 1024)))

    # Dtype-aware sublane quantum: 8 rows/vreg f32, 16 bf16, 32 int8/fp8.
    row_quantum = 8 * max(1, 4 // itemsize)

    block_rows = (target_block_bytes // (lane * itemsize)) // row_quantum * row_quantum
    block_rows = max(row_quantum, block_rows)

    if block_rows >= rows:
        # Whole tensor fits one block.  Split in two when (8,128)-legal so the
        # "parallel" axis can occupy both v7x TensorCores.
        half = pl.cdiv(pl.cdiv(rows, 2), row_quantum) * row_quantum
        block_rows = half if half < rows else rows
    else:
        # Best effort: prefer an even block count for 2-TC load balance.
        nblk = pl.cdiv(rows, block_rows)
        if nblk % 2 == 1:
            nblk += 1
            block_rows = max(row_quantum,
                             pl.cdiv(pl.cdiv(rows, nblk), row_quantum) * row_quantum)

    grid = (pl.cdiv(rows, block_rows),)      # ragged last block masked by Pallas

    lam_arr = jnp.asarray([lambd], dtype=jnp.float32)   # SMEM scalar, no retrace

    out2d = pl.pallas_call(
        _softshrink_kernel,
        out_shape=jax.ShapeDtypeStruct((rows, lane), dtype),
        grid_spec=pltpu.PrefetchScalarGridSpec(
            num_scalar_prefetch=1,
            grid=grid,
            in_specs=[pl.BlockSpec((block_rows, lane), lambda i, lam: (i, 0))],
            out_specs=pl.BlockSpec((block_rows, lane), lambda i, lam: (i, 0)),
        ),
        compiler_params=pltpu.CompilerParams(
            dimension_semantics=("parallel",),
            vmem_limit_bytes=vmem_limit),
        cost_estimate=pl.CostEstimate(
            flops=3 * n,
            transcendentals=0,
            bytes_accessed=2 * n * itemsize),
        # x is operand index 1 (index 0 is the prefetched lambd scalar).
        input_output_aliases=({1: 0} if donate_input else {}),
    )(lam_arr, x2d)

    return out2d.reshape(orig_shape)


if __name__ == "__main__":
    key = jax.random.PRNGKey(0)
    k1, k2, k3, k4 = jax.random.split(key, 4)

    def ref_fn(x, lambd=0.5):
        xf = x.astype(jnp.float32)
        return (jnp.maximum(jnp.abs(xf) - lambd, 0.0) * jnp.sign(xf)).astype(x.dtype)

    # 1) Main test (module-consistent small NCHW): single-block fast path.
    x = jax.random.normal(k1, (2, 4, 16, 16), dtype=jnp.float32)
    y = modified_softshrink(x, lambd=0.5)
    jax.block_until_ready(y)
    assert y.shape == x.shape and y.dtype == x.dtype
    assert jnp.allclose(y, ref_fn(x), atol=1e-6), "mismatch vs reference (f32)"

    # 2) Multi-block grid (small blocks force grid > 1, exercises even-ing
    #    and Pallas handling of the blocked layout).
    x2 = jax.random.normal(k2, (4, 8, 32, 32), dtype=jnp.float32)
    y2 = modified_softshrink(x2, lambd=0.5, target_block_bytes=64 * 1024)
    jax.block_until_ready(y2)
    assert jnp.allclose(y2, ref_fn(x2), atol=1e-6), "mismatch (multi-block)"

    # 3) bf16 path (dtype-aware sublane quantum, f32 internal compute).
    x3 = jax.random.normal(k3, (2, 4, 16, 16), dtype=jnp.bfloat16)
    y3 = modified_softshrink(x3, lambd=0.5)
    jax.block_until_ready(y3)
    assert y3.dtype == jnp.bfloat16
    assert jnp.allclose(y3.astype(jnp.float32), ref_fn(x3).astype(jnp.float32),
                        atol=1e-2), "mismatch (bf16)"

    # 4) Ragged element count -> single fused elementwise pass (no pad copy).
    x4 = jax.random.normal(k4, (2, 3, 17, 13), dtype=jnp.float32)
    y4 = modified_softshrink(x4, lambd=0.5)
    jax.block_until_ready(y4)
    assert jnp.allclose(y4, ref_fn(x4), atol=1e-6), "mismatch (ragged)"

    print("KERNEL_OK")
</pallas_src>

<mosaic_0001>
module attributes {stable_mosaic.version = 11 : i64} {
  func.func @_softshrink_kernel(%arg0: i32, %arg1: memref<1xf32, #tpu.memory_space<smem>>, %arg2: memref<2x1024xf32, #tpu.memory_space<vmem>>, %arg3: memref<2x1024xf32, #tpu.memory_space<vmem>>) attributes {dimension_semantics = [#tpu.dimension_semantics<parallel>], iteration_bounds = array<i64: 1>, scalar_prefetch = 1 : i64, scratch_operands = 0 : i64, tpu.core_type = #tpu.core_type<tc>, window_params = [{transform_indices = @transform_0, window_bounds = array<i64: 2, 1024>}, {transform_indices = @transform_1, window_bounds = array<i64: 2, 1024>}]} {
    %c0 = arith.constant 0 : index
    %0 = memref.load %arg1[%c0] : memref<1xf32, #tpu.memory_space<smem>>
    %c0_0 = arith.constant 0 : index
    %c0_1 = arith.constant 0 : index
    %1 = vector.load %arg2[%c0_0, %c0_1] : memref<2x1024xf32, #tpu.memory_space<vmem>>, vector<2x1024xf32>
    %cst = arith.constant 0.000000e+00 : f32
    %2 = arith.subf %cst, %0 : f32
    %3 = vector.broadcast %2 : f32 to vector<2x1024xf32>
    %4 = arith.maximumf %3, %1 : vector<2x1024xf32>
    %5 = vector.broadcast %0 : f32 to vector<2x1024xf32>
    %6 = arith.minimumf %5, %4 : vector<2x1024xf32>
    %7 = arith.subf %1, %6 : vector<2x1024xf32>
    %c0_2 = arith.constant 0 : index
    %c0_3 = arith.constant 0 : index
    %8 = vector.load %arg3[%c0_2, %c0_3] : memref<2x1024xf32, #tpu.memory_space<vmem>>, vector<2x1024xf32>
    tpu.vector_store %arg3[%c0_2, %c0_3], %7 {strides = array<i32>} : memref<2x1024xf32, #tpu.memory_space<vmem>>, vector<2x1024xf32>,
    return
  }
  func.func @transform_0(%arg0: i32, %arg1: memref<1xf32, #tpu.memory_space<smem>>) -> (i32, i32) {
    %c0_i32 = arith.constant 0 : i32
    %c0_i32_0 = arith.constant 0 : i32
    return %arg0, %c0_i32 : i32, i32
  }
  func.func @transform_1(%arg0: i32, %arg1: memref<1xf32, #tpu.memory_space<smem>>) -> (i32, i32) {
    %c0_i32 = arith.constant 0 : i32
    %c0_i32_0 = arith.constant 0 : i32
    return %arg0, %c0_i32 : i32, i32
  }
}

</mosaic_0001>

<llo_original>
// kernel: tpu_custom_call.1
$region0: #{tpu_custom_call.1}
  #allocation0 [shape = 'u32[]', space=smem, size = 0x4, offset = 0x4, fixed_abs, tag = 'smem constant byte address 0x4 - core index']
  #allocation1 [shape = 'u32[144,128]{1,0:T(1,128)}', space=vmem, size = 0x12000, scoped, tag = 'internal scratch']
  #allocation2 [shape = 's32[1]{0}', space=sflag, size = 0x4, scoped, tag = 'scoped memory for tpu_custom_call.1']
  #allocation3 [shape = 'f32[1]{0:T(128)S(6)}', space=smem, size = 0x200, scoped, tag = 'prefetched SMEM operand 0']
  %s0 = inlined_call_operand.<no memory space> [shape: f32[1], index: 0, kind: input, shape index: {}]
  %s1 = inlined_call_operand.hbm [shape: f32[2,1024], index: 1, kind: input, shape index: {}]
  %s2 = inlined_call_operand.hbm [shape: f32[2,1024], index: 2, kind: output, shape index: {}]
  %s3 = sld [smem:[#allocation0]]
  $region18: #{tpu_custom_call.1} parent=0
    _
  %s5 = ssub.s32 1, %s3
  %s6 = scalar_select 0, %s5, %s3
  %7 = sst [smem:[#allocation3]] %s0
  $region1: #{tpu_custom_call.1} parent=0
    #allocation4 [shape = 'u8[8192]{0}', space=vmem, size = 0x2000, scoped, tag = 'input window, operand 1, single buffered']
    #allocation5 [shape = 's32[1]{0}', space=sflag, size = 0x4, scoped, tag = 'scoped memory for tpu_custom_call.1']
    #allocation6 [shape = 's32[1]{0}', space=sflag, size = 0x4, scoped, tag = 'scoped memory for tpu_custom_call.1']
    #allocation7 [shape = 'u8[8192]{0}', space=vmem, size = 0x2000, scoped, tag = 'output window, operand 0, single buffered']
    %8 = vsyncpa [#allocation5], 0
    %9 = vsyncpa [#allocation6], 0
    // Predicated region
    $region2: #{tpu_custom_call.1} parent=1 // pred_check
      _
    $region3: #{tpu_custom_call.1} parent=1 // pred_check_branch
      %11 = sbr.rel (0) target = $region5
    $region4: #{tpu_custom_call.1} parent=1 // pred_region
      %s13 = ssub.s32 256, 256
      %14 = vsyncadd [#allocation5], %s13
      %s16 = sshll.u32 [#allocation4], 4
      %s17 = int_to_ptr.vmem [resolvable:$true] %s16
      %19 = dma.hbm_to_vmem [thread:$0]  %s1, 256, %s17, [#allocation5]
    $region5: #{tpu_custom_call.1} parent=1 // pred_fallthru
      _
    // Predicated region
    $region6: #{tpu_custom_call.1} parent=1 // pred_check
      _
    $region7: #{tpu_custom_call.1} parent=1 // pred_check_branch
      %21 = sbr.rel (0) target = $region9
    $region8: #{tpu_custom_call.1} parent=1 // pred_region
      %22 = dma.done [#allocation5], 256
    $region9: #{tpu_custom_call.1} parent=1 // pred_fallthru
      _
    %s23 = sld [smem:[#allocation3]]
    %v24 = vld [vmem:[#allocation4] sm:$0xff]
    %v25 = vld [vmem:[#allocation4 + $0x8] sm:$0xff]
    %s26 = ssub.f32 0.0, %s23
    %v27 = vstv %s26
    %v28 = vmax.f32 %v27, %v24
    %v29 = vmax.f32 %v27, %v25
    %v30 = vstv %s23
    %v31 = vmin.f32 %v30, %v28
    %v32 = vmin.f32 %v30, %v29
    %v33 = vsub.f32 %v24, %v31
    %v34 = vsub.f32 %v25, %v32
    %35 = vst [vmem:[#allocation7] sm:$0xff] %v33
    %36 = vst [vmem:[#allocation7 + $0x8] sm:$0xff] %v34
    // Predicated region
    $region10: #{tpu_custom_call.1} parent=1 // pred_check
      _
    $region11: #{tpu_custom_call.1} parent=1 // pred_check_branch
      %38 = sbr.rel (0) target = $region13
    $region12: #{tpu_custom_call.1} parent=1 // pred_region
      %s40 = ssub.s32 256, 256
      %41 = vsyncadd [#allocation6], %s40
      %s43 = sshll.u32 [#allocation7], 4
      %s44 = int_to_ptr.vmem [resolvable:$true] %s43
      %46 = dma.vmem_to_hbm [thread:$0]  %s44, 256, %s2, [#allocation6]
    $region13: #{tpu_custom_call.1} parent=1 // pred_fallthru
      _
    // Predicated region
    $region14: #{tpu_custom_call.1} parent=1 // pred_check
      _
    $region15: #{tpu_custom_call.1} parent=1 // pred_check_branch
      %48 = sbr.rel (0) target = $region17
    $region16: #{tpu_custom_call.1} parent=1 // pred_region
      %49 = dma.done [#allocation6], 256
    $region17: #{tpu_custom_call.1} parent=1 // pred_fallthru
      _
    %50 = vsyncpa [#allocation5], 1
    %51 = vsyncpa [#allocation6], 1

</llo_original>
